<compile_context>
chip_gen: v7x
topology: tpu7x:2x2x1
jax: 0.10.0
libtpu: 0.0.40
codegen_flags: <defaults>
</compile_context>

<pallas_src>
import jax
import jax.numpy as jnp
from jax import lax
from jax.experimental import pallas as pl
from jax.experimental.pallas import tpu as pltpu


def _ricker_kernel(coef_ref, c_ref, out_ref):
    # coef_ref: VMEM (2, 2) f32   row0 = [a1*b1, a2*b2], row1 = [a1*g1, a2*g2]
    # c_ref:    VMEM (T, 2) f32   c_k[i] = alpha_k*(1 + bx_k*t_i + cx_k*t_i^2)
    # out_ref:  VMEM (T, 2) f32   out[i] = [n1_i, n2_i]
    T = out_ref.shape[0]

    # Hoisted once into vregs (no per-iteration scalar->vreg broadcasts).
    ab = coef_ref[0:1, :]          # (1, 2)
    ag = coef_ref[1:2, :]          # (1, 2)

    init = jnp.ones((1, 2), jnp.float32)
    out_ref[0:1, :] = init         # initial condition: out[:, 0] = 1

    def body(i, state):
        # state = [n1, n2] as a single 2-lane vreg.
        total = jnp.sum(state, axis=-1, keepdims=True)   # (1,1) = n1 + n2
        cross = total - state                            # (1,2) = [n2, n1]
        c_row = c_ref[pl.ds(i, 1), :]                    # (1,2)
        arg = c_row - ab * state - ag * cross            # short VPU chain
        new_state = state * jnp.exp(arg)                 # single EUP exp
        out_ref[pl.ds(i + 1, 1), :] = new_state          # one O(1) store/step
        return new_state

    # Full unroll for small static T (store offsets become static); partial
    # unroll otherwise to amortize scalar loop overhead.
    unroll = True if (T - 1) <= 128 else 8
    lax.fori_loop(0, T - 1, body, init, unroll=unroll)


def ricker_predation(params, temp):
    """Pallas implementation of Ricker_Predation.forward (noise=None path)."""
    # TODO(synk): noise branch (sigma * torch.normal(0, 0.1)) not implemented;
    #             it would need pltpu.prng_seed/prng_random_bits and cannot
    #             bit-match torch's RNG anyway.
    temp = jnp.reshape(jnp.asarray(temp), (-1,)).astype(jnp.float32)  # robust squeeze
    T = int(temp.shape[0])

    p = jnp.asarray(params, jnp.float32).reshape(10)
    alpha1, beta1, gamma1, bx1, cx1 = p[0], p[1], p[2], p[3], p[4]
    alpha2, beta2, gamma2, bx2, cx2 = p[5], p[6], p[7], p[8], p[9]

    # Temperature-only polynomial, computed vectorized OFF the serial chain,
    # fused into a single (T, 2) VMEM array.
    c1 = alpha1 * (1.0 + bx1 * temp + cx1 * temp * temp)
    c2 = alpha2 * (1.0 + bx2 * temp + cx2 * temp * temp)
    c = jnp.stack([c1, c2], axis=-1).astype(jnp.float32)              # (T, 2)

    coef = jnp.stack(
        [jnp.stack([alpha1 * beta1, alpha2 * beta2]),
         jnp.stack([alpha1 * gamma1, alpha2 * gamma2])]
    ).astype(jnp.float32)                                             # (2, 2)

    out = pl.pallas_call(
        _ricker_kernel,
        out_shape=jax.ShapeDtypeStruct((T, 2), jnp.float32),
        in_specs=[
            pl.BlockSpec(memory_space=pltpu.MemorySpace.VMEM),
            pl.BlockSpec(memory_space=pltpu.MemorySpace.VMEM),
        ],
        out_specs=pl.BlockSpec(memory_space=pltpu.MemorySpace.VMEM),
    )(coef, c)

    # (T,2) -> (2,T), same axis convention as the torch module.
    return out.T


def ricker_predation_ref(params, temp):
    """Pure-JAX reference (mirrors the torch loop exactly, in f32)."""
    temp = jnp.reshape(jnp.asarray(temp), (-1,)).astype(jnp.float32)
    T = int(temp.shape[0])
    p = jnp.asarray(params, jnp.float32).reshape(10)
    a1, b1, g1, bx1, cx1, a2, b2, g2, bx2, cx2 = [p[k] for k in range(10)]
    out = jnp.ones((2, T), jnp.float32)

    def body(i, out):
        n1 = out[0, i]
        n2 = out[1, i]
        t = temp[i]
        new1 = n1 * jnp.exp(a1 * (1.0 - b1 * n1 - g1 * n2 + bx1 * t + cx1 * t * t))
        new2 = n2 * jnp.exp(a2 * (1.0 - b2 * n2 - g2 * n1 + bx2 * t + cx2 * t * t))
        out = out.at[0, i + 1].set(new1)
        out = out.at[1, i + 1].set(new2)
        return out

    return lax.fori_loop(0, T - 1, body, out)


if __name__ == "__main__":
    # model_params: [alpha1,beta1,gamma1,bx1,cx1,alpha2,beta2,gamma2,bx2,cx2]
    params = jnp.array(
        [0.5, 0.10, 0.05, 0.02, -0.001,
         0.4, 0.08, 0.04, 0.015, -0.0005],
        dtype=jnp.float32,
    )

    key = jax.random.PRNGKey(0)
    T = 16
    # Temp arrives as (1, T); forward squeezes it to (T,).
    Temp = 0.5 * jax.random.normal(key, (1, T), dtype=jnp.float32)

    out = jax.block_until_ready(ricker_predation(params, Temp))
    ref = jax.block_until_ready(ricker_predation_ref(params, Temp))

    assert out.shape == (2, T), out.shape
    # Small tolerance slack: the kernel pre-folds alpha into the polynomial and
    # forms the cross term as (n1+n2)-n_k (mathematically identical, slightly
    # different f32 rounding).
    assert jnp.allclose(out, ref, rtol=1e-4, atol=1e-5), (out, ref)

    print("KERNEL_OK")
</pallas_src>

<mosaic_0001>
module attributes {stable_mosaic.version = 11 : i64} {
  func.func @_ricker_kernel(%arg0: memref<2x2xf32, #tpu.memory_space<vmem>>, %arg1: memref<16x2xf32, #tpu.memory_space<vmem>>, %arg2: memref<16x2xf32, #tpu.memory_space<vmem>>) attributes {dimension_semantics = [], scalar_prefetch = 0 : i64, scratch_operands = 0 : i64, tpu.core_type = #tpu.core_type<tc>} {
    %c0 = arith.constant 0 : index
    %c0_0 = arith.constant 0 : index
    %0 = vector.load %arg0[%c0, %c0_0] : memref<2x2xf32, #tpu.memory_space<vmem>>, vector<1x2xf32>
    %c1 = arith.constant 1 : index
    %c0_1 = arith.constant 0 : index
    %1 = vector.load %arg0[%c1, %c0_1] : memref<2x2xf32, #tpu.memory_space<vmem>>, vector<1x2xf32>
    %cst = arith.constant 1.000000e+00 : f32
    %2 = vector.broadcast %cst : f32 to vector<1x2xf32>
    %c0_2 = arith.constant 0 : index
    %c0_3 = arith.constant 0 : index
    %3 = vector.load %arg2[%c0_2, %c0_3] : memref<16x2xf32, #tpu.memory_space<vmem>>, vector<1x2xf32>
    tpu.vector_store %arg2[%c0_2, %c0_3], %2 {strides = array<i32>} : memref<16x2xf32, #tpu.memory_space<vmem>>, vector<1x2xf32>,
    %c0_i32 = arith.constant 0 : i32
    %cst_4 = arith.constant dense<0.000000e+00> : vector<1xf32>
    %4 = vector.multi_reduction <add>, %2, %cst_4 [1] : vector<1x2xf32> to vector<1xf32>
    %5 = vector.shape_cast %4 : vector<1xf32> to vector<1x1xf32>
    %6 = vector.broadcast %5 : vector<1x1xf32> to vector<1x2xf32>
    %7 = arith.subf %6, %2 : vector<1x2xf32>
    %8 = arith.index_cast %c0_i32 : i32 to index
    %c0_5 = arith.constant 0 : index
    %9 = vector.load %arg1[%8, %c0_5] : memref<16x2xf32, #tpu.memory_space<vmem>>, vector<1x2xf32>
    %10 = arith.mulf %0, %2 : vector<1x2xf32>
    %11 = arith.subf %9, %10 : vector<1x2xf32>
    %12 = arith.mulf %1, %7 : vector<1x2xf32>
    %13 = arith.subf %11, %12 : vector<1x2xf32>
    %14 = math.exp %13 : vector<1x2xf32>
    %15 = arith.mulf %2, %14 : vector<1x2xf32>
    %c1_i32 = arith.constant 1 : i32
    %16 = arith.addi %c0_i32, %c1_i32 : i32
    %17 = arith.index_cast %16 : i32 to index
    %c0_6 = arith.constant 0 : index
    %18 = vector.load %arg2[%17, %c0_6] : memref<16x2xf32, #tpu.memory_space<vmem>>, vector<1x2xf32>
    tpu.vector_store %arg2[%17, %c0_6], %15 {strides = array<i32>} : memref<16x2xf32, #tpu.memory_space<vmem>>, vector<1x2xf32>,
    %c1_i32_7 = arith.constant 1 : i32
    %cst_8 = arith.constant dense<0.000000e+00> : vector<1xf32>
    %19 = vector.multi_reduction <add>, %15, %cst_8 [1] : vector<1x2xf32> to vector<1xf32>
    %20 = vector.shape_cast %19 : vector<1xf32> to vector<1x1xf32>
    %21 = vector.broadcast %20 : vector<1x1xf32> to vector<1x2xf32>
    %22 = arith.subf %21, %15 : vector<1x2xf32>
    %23 = arith.index_cast %c1_i32_7 : i32 to index
    %c0_9 = arith.constant 0 : index
    %24 = vector.load %arg1[%23, %c0_9] : memref<16x2xf32, #tpu.memory_space<vmem>>, vector<1x2xf32>
    %25 = arith.mulf %0, %15 : vector<1x2xf32>
    %26 = arith.subf %24, %25 : vector<1x2xf32>
    %27 = arith.mulf %1, %22 : vector<1x2xf32>
    %28 = arith.subf %26, %27 : vector<1x2xf32>
    %29 = math.exp %28 : vector<1x2xf32>
    %30 = arith.mulf %15, %29 : vector<1x2xf32>
    %c1_i32_10 = arith.constant 1 : i32
    %31 = arith.addi %c1_i32_7, %c1_i32_10 : i32
    %32 = arith.index_cast %31 : i32 to index
    %c0_11 = arith.constant 0 : index
    %33 = vector.load %arg2[%32, %c0_11] : memref<16x2xf32, #tpu.memory_space<vmem>>, vector<1x2xf32>
    tpu.vector_store %arg2[%32, %c0_11], %30 {strides = array<i32>} : memref<16x2xf32, #tpu.memory_space<vmem>>, vector<1x2xf32>,
    %c2_i32 = arith.constant 2 : i32
    %cst_12 = arith.constant dense<0.000000e+00> : vector<1xf32>
    %34 = vector.multi_reduction <add>, %30, %cst_12 [1] : vector<1x2xf32> to vector<1xf32>
    %35 = vector.shape_cast %34 : vector<1xf32> to vector<1x1xf32>
    %36 = vector.broadcast %35 : vector<1x1xf32> to vector<1x2xf32>
    %37 = arith.subf %36, %30 : vector<1x2xf32>
    %38 = arith.index_cast %c2_i32 : i32 to index
    %c0_13 = arith.constant 0 : index
    %39 = vector.load %arg1[%38, %c0_13] : memref<16x2xf32, #tpu.memory_space<vmem>>, vector<1x2xf32>
    %40 = arith.mulf %0, %30 : vector<1x2xf32>
    %41 = arith.subf %39, %40 : vector<1x2xf32>
    %42 = arith.mulf %1, %37 : vector<1x2xf32>
    %43 = arith.subf %41, %42 : vector<1x2xf32>
    %44 = math.exp %43 : vector<1x2xf32>
    %45 = arith.mulf %30, %44 : vector<1x2xf32>
    %c1_i32_14 = arith.constant 1 : i32
    %46 = arith.addi %c2_i32, %c1_i32_14 : i32
    %47 = arith.index_cast %46 : i32 to index
    %c0_15 = arith.constant 0 : index
    %48 = vector.load %arg2[%47, %c0_15] : memref<16x2xf32, #tpu.memory_space<vmem>>, vector<1x2xf32>
    tpu.vector_store %arg2[%47, %c0_15], %45 {strides = array<i32>} : memref<16x2xf32, #tpu.memory_space<vmem>>, vector<1x2xf32>,
    %c3_i32 = arith.constant 3 : i32
    %cst_16 = arith.constant dense<0.000000e+00> : vector<1xf32>
    %49 = vector.multi_reduction <add>, %45, %cst_16 [1] : vector<1x2xf32> to vector<1xf32>
    %50 = vector.shape_cast %49 : vector<1xf32> to vector<1x1xf32>
    %51 = vector.broadcast %50 : vector<1x1xf32> to vector<1x2xf32>
    %52 = arith.subf %51, %45 : vector<1x2xf32>
    %53 = arith.index_cast %c3_i32 : i32 to index
    %c0_17 = arith.constant 0 : index
    %54 = vector.load %arg1[%53, %c0_17] : memref<16x2xf32, #tpu.memory_space<vmem>>, vector<1x2xf32>
    %55 = arith.mulf %0, %45 : vector<1x2xf32>
    %56 = arith.subf %54, %55 : vector<1x2xf32>
    %57 = arith.mulf %1, %52 : vector<1x2xf32>
    %58 = arith.subf %56, %57 : vector<1x2xf32>
    %59 = math.exp %58 : vector<1x2xf32>
    %60 = arith.mulf %45, %59 : vector<1x2xf32>
    %c1_i32_18 = arith.constant 1 : i32
    %61 = arith.addi %c3_i32, %c1_i32_18 : i32
    %62 = arith.index_cast %61 : i32 to index
    %c0_19 = arith.constant 0 : index
    %63 = vector.load %arg2[%62, %c0_19] : memref<16x2xf32, #tpu.memory_space<vmem>>, vector<1x2xf32>
    tpu.vector_store %arg2[%62, %c0_19], %60 {strides = array<i32>} : memref<16x2xf32, #tpu.memory_space<vmem>>, vector<1x2xf32>,
    %c4_i32 = arith.constant 4 : i32
    %cst_20 = arith.constant dense<0.000000e+00> : vector<1xf32>
    %64 = vector.multi_reduction <add>, %60, %cst_20 [1] : vector<1x2xf32> to vector<1xf32>
    %65 = vector.shape_cast %64 : vector<1xf32> to vector<1x1xf32>
    %66 = vector.broadcast %65 : vector<1x1xf32> to vector<1x2xf32>
    %67 = arith.subf %66, %60 : vector<1x2xf32>
    %68 = arith.index_cast %c4_i32 : i32 to index
    %c0_21 = arith.constant 0 : index
    %69 = vector.load %arg1[%68, %c0_21] : memref<16x2xf32, #tpu.memory_space<vmem>>, vector<1x2xf32>
    %70 = arith.mulf %0, %60 : vector<1x2xf32>
    %71 = arith.subf %69, %70 : vector<1x2xf32>
    %72 = arith.mulf %1, %67 : vector<1x2xf32>
    %73 = arith.subf %71, %72 : vector<1x2xf32>
    %74 = math.exp %73 : vector<1x2xf32>
    %75 = arith.mulf %60, %74 : vector<1x2xf32>
    %c1_i32_22 = arith.constant 1 : i32
    %76 = arith.addi %c4_i32, %c1_i32_22 : i32
    %77 = arith.index_cast %76 : i32 to index
    %c0_23 = arith.constant 0 : index
    %78 = vector.load %arg2[%77, %c0_23] : memref<16x2xf32, #tpu.memory_space<vmem>>, vector<1x2xf32>
    tpu.vector_store %arg2[%77, %c0_23], %75 {strides = array<i32>} : memref<16x2xf32, #tpu.memory_space<vmem>>, vector<1x2xf32>,
    %c5_i32 = arith.constant 5 : i32
    %cst_24 = arith.constant dense<0.000000e+00> : vector<1xf32>
    %79 = vector.multi_reduction <add>, %75, %cst_24 [1] : vector<1x2xf32> to vector<1xf32>
    %80 = vector.shape_cast %79 : vector<1xf32> to vector<1x1xf32>
    %81 = vector.broadcast %80 : vector<1x1xf32> to vector<1x2xf32>
    %82 = arith.subf %81, %75 : vector<1x2xf32>
    %83 = arith.index_cast %c5_i32 : i32 to index
    %c0_25 = arith.constant 0 : index
    %84 = vector.load %arg1[%83, %c0_25] : memref<16x2xf32, #tpu.memory_space<vmem>>, vector<1x2xf32>
    %85 = arith.mulf %0, %75 : vector<1x2xf32>
    %86 = arith.subf %84, %85 : vector<1x2xf32>
    %87 = arith.mulf %1, %82 : vector<1x2xf32>
    %88 = arith.subf %86, %87 : vector<1x2xf32>
    %89 = math.exp %88 : vector<1x2xf32>
    %90 = arith.mulf %75, %89 : vector<1x2xf32>
    %c1_i32_26 = arith.constant 1 : i32
    %91 = arith.addi %c5_i32, %c1_i32_26 : i32
    %92 = arith.index_cast %91 : i32 to index
    %c0_27 = arith.constant 0 : index
    %93 = vector.load %arg2[%92, %c0_27] : memref<16x2xf32, #tpu.memory_space<vmem>>, vector<1x2xf32>
    tpu.vector_store %arg2[%92, %c0_27], %90 {strides = array<i32>} : memref<16x2xf32, #tpu.memory_space<vmem>>, vector<1x2xf32>,
    %c6_i32 = arith.constant 6 : i32
    %cst_28 = arith.constant dense<0.000000e+00> : vector<1xf32>
    %94 = vector.multi_reduction <add>, %90, %cst_28 [1] : vector<1x2xf32> to vector<1xf32>
    %95 = vector.shape_cast %94 : vector<1xf32> to vector<1x1xf32>
    %96 = vector.broadcast %95 : vector<1x1xf32> to vector<1x2xf32>
    %97 = arith.subf %96, %90 : vector<1x2xf32>
    %98 = arith.index_cast %c6_i32 : i32 to index
    %c0_29 = arith.constant 0 : index
    %99 = vector.load %arg1[%98, %c0_29] : memref<16x2xf32, #tpu.memory_space<vmem>>, vector<1x2xf32>
    %100 = arith.mulf %0, %90 : vector<1x2xf32>
    %101 = arith.subf %99, %100 : vector<1x2xf32>
    %102 = arith.mulf %1, %97 : vector<1x2xf32>
    %103 = arith.subf %101, %102 : vector<1x2xf32>
    %104 = math.exp %103 : vector<1x2xf32>
    %105 = arith.mulf %90, %104 : vector<1x2xf32>
    %c1_i32_30 = arith.constant 1 : i32
    %106 = arith.addi %c6_i32, %c1_i32_30 : i32
    %107 = arith.index_cast %106 : i32 to index
    %c0_31 = arith.constant 0 : index
    %108 = vector.load %arg2[%107, %c0_31] : memref<16x2xf32, #tpu.memory_space<vmem>>, vector<1x2xf32>
    tpu.vector_store %arg2[%107, %c0_31], %105 {strides = array<i32>} : memref<16x2xf32, #tpu.memory_space<vmem>>, vector<1x2xf32>,
    %c7_i32 = arith.constant 7 : i32
    %cst_32 = arith.constant dense<0.000000e+00> : vector<1xf32>
    %109 = vector.multi_reduction <add>, %105, %cst_32 [1] : vector<1x2xf32> to vector<1xf32>
    %110 = vector.shape_cast %109 : vector<1xf32> to vector<1x1xf32>
    %111 = vector.broadcast %110 : vector<1x1xf32> to vector<1x2xf32>
    %112 = arith.subf %111, %105 : vector<1x2xf32>
    %113 = arith.index_cast %c7_i32 : i32 to index
    %c0_33 = arith.constant 0 : index
    %114 = vector.load %arg1[%113, %c0_33] : memref<16x2xf32, #tpu.memory_space<vmem>>, vector<1x2xf32>
    %115 = arith.mulf %0, %105 : vector<1x2xf32>
    %116 = arith.subf %114, %115 : vector<1x2xf32>
    %117 = arith.mulf %1, %112 : vector<1x2xf32>
    %118 = arith.subf %116, %117 : vector<1x2xf32>
    %119 = math.exp %118 : vector<1x2xf32>
    %120 = arith.mulf %105, %119 : vector<1x2xf32>
    %c1_i32_34 = arith.constant 1 : i32
    %121 = arith.addi %c7_i32, %c1_i32_34 : i32
    %122 = arith.index_cast %121 : i32 to index
    %c0_35 = arith.constant 0 : index
    %123 = vector.load %arg2[%122, %c0_35] : memref<16x2xf32, #tpu.memory_space<vmem>>, vector<1x2xf32>
    tpu.vector_store %arg2[%122, %c0_35], %120 {strides = array<i32>} : memref<16x2xf32, #tpu.memory_space<vmem>>, vector<1x2xf32>,
    %c8_i32 = arith.constant 8 : i32
    %cst_36 = arith.constant dense<0.000000e+00> : vector<1xf32>
    %124 = vector.multi_reduction <add>, %120, %cst_36 [1] : vector<1x2xf32> to vector<1xf32>
    %125 = vector.shape_cast %124 : vector<1xf32> to vector<1x1xf32>
    %126 = vector.broadcast %125 : vector<1x1xf32> to vector<1x2xf32>
    %127 = arith.subf %126, %120 : vector<1x2xf32>
    %128 = arith.index_cast %c8_i32 : i32 to index
    %c0_37 = arith.constant 0 : index
    %129 = vector.load %arg1[%128, %c0_37] : memref<16x2xf32, #tpu.memory_space<vmem>>, vector<1x2xf32>
    %130 = arith.mulf %0, %120 : vector<1x2xf32>
    %131 = arith.subf %129, %130 : vector<1x2xf32>
    %132 = arith.mulf %1, %127 : vector<1x2xf32>
    %133 = arith.subf %131, %132 : vector<1x2xf32>
    %134 = math.exp %133 : vector<1x2xf32>
    %135 = arith.mulf %120, %134 : vector<1x2xf32>
    %c1_i32_38 = arith.constant 1 : i32
    %136 = arith.addi %c8_i32, %c1_i32_38 : i32
    %137 = arith.index_cast %136 : i32 to index
    %c0_39 = arith.constant 0 : index
    %138 = vector.load %arg2[%137, %c0_39] : memref<16x2xf32, #tpu.memory_space<vmem>>, vector<1x2xf32>
    tpu.vector_store %arg2[%137, %c0_39], %135 {strides = array<i32>} : memref<16x2xf32, #tpu.memory_space<vmem>>, vector<1x2xf32>,
    %c9_i32 = arith.constant 9 : i32
    %cst_40 = arith.constant dense<0.000000e+00> : vector<1xf32>
    %139 = vector.multi_reduction <add>, %135, %cst_40 [1] : vector<1x2xf32> to vector<1xf32>
    %140 = vector.shape_cast %139 : vector<1xf32> to vector<1x1xf32>
    %141 = vector.broadcast %140 : vector<1x1xf32> to vector<1x2xf32>
    %142 = arith.subf %141, %135 : vector<1x2xf32>
    %143 = arith.index_cast %c9_i32 : i32 to index
    %c0_41 = arith.constant 0 : index
    %144 = vector.load %arg1[%143, %c0_41] : memref<16x2xf32, #tpu.memory_space<vmem>>, vector<1x2xf32>
    %145 = arith.mulf %0, %135 : vector<1x2xf32>
    %146 = arith.subf %144, %145 : vector<1x2xf32>
    %147 = arith.mulf %1, %142 : vector<1x2xf32>
    %148 = arith.subf %146, %147 : vector<1x2xf32>
    %149 = math.exp %148 : vector<1x2xf32>
    %150 = arith.mulf %135, %149 : vector<1x2xf32>
    %c1_i32_42 = arith.constant 1 : i32
    %151 = arith.addi %c9_i32, %c1_i32_42 : i32
    %152 = arith.index_cast %151 : i32 to index
    %c0_43 = arith.constant 0 : index
    %153 = vector.load %arg2[%152, %c0_43] : memref<16x2xf32, #tpu.memory_space<vmem>>, vector<1x2xf32>
    tpu.vector_store %arg2[%152, %c0_43], %150 {strides = array<i32>} : memref<16x2xf32, #tpu.memory_space<vmem>>, vector<1x2xf32>,
    %c10_i32 = arith.constant 10 : i32
    %cst_44 = arith.constant dense<0.000000e+00> : vector<1xf32>
    %154 = vector.multi_reduction <add>, %150, %cst_44 [1] : vector<1x2xf32> to vector<1xf32>
    %155 = vector.shape_cast %154 : vector<1xf32> to vector<1x1xf32>
    %156 = vector.broadcast %155 : vector<1x1xf32> to vector<1x2xf32>
    %157 = arith.subf %156, %150 : vector<1x2xf32>
    %158 = arith.index_cast %c10_i32 : i32 to index
    %c0_45 = arith.constant 0 : index
    %159 = vector.load %arg1[%158, %c0_45] : memref<16x2xf32, #tpu.memory_space<vmem>>, vector<1x2xf32>
    %160 = arith.mulf %0, %150 : vector<1x2xf32>
    %161 = arith.subf %159, %160 : vector<1x2xf32>
    %162 = arith.mulf %1, %157 : vector<1x2xf32>
    %163 = arith.subf %161, %162 : vector<1x2xf32>
    %164 = math.exp %163 : vector<1x2xf32>
    %165 = arith.mulf %150, %164 : vector<1x2xf32>
    %c1_i32_46 = arith.constant 1 : i32
    %166 = arith.addi %c10_i32, %c1_i32_46 : i32
    %167 = arith.index_cast %166 : i32 to index
    %c0_47 = arith.constant 0 : index
    %168 = vector.load %arg2[%167, %c0_47] : memref<16x2xf32, #tpu.memory_space<vmem>>, vector<1x2xf32>
    tpu.vector_store %arg2[%167, %c0_47], %165 {strides = array<i32>} : memref<16x2xf32, #tpu.memory_space<vmem>>, vector<1x2xf32>,
    %c11_i32 = arith.constant 11 : i32
    %cst_48 = arith.constant dense<0.000000e+00> : vector<1xf32>
    %169 = vector.multi_reduction <add>, %165, %cst_48 [1] : vector<1x2xf32> to vector<1xf32>
    %170 = vector.shape_cast %169 : vector<1xf32> to vector<1x1xf32>
    %171 = vector.broadcast %170 : vector<1x1xf32> to vector<1x2xf32>
    %172 = arith.subf %171, %165 : vector<1x2xf32>
    %173 = arith.index_cast %c11_i32 : i32 to index
    %c0_49 = arith.constant 0 : index
    %174 = vector.load %arg1[%173, %c0_49] : memref<16x2xf32, #tpu.memory_space<vmem>>, vector<1x2xf32>
    %175 = arith.mulf %0, %165 : vector<1x2xf32>
    %176 = arith.subf %174, %175 : vector<1x2xf32>
    %177 = arith.mulf %1, %172 : vector<1x2xf32>
    %178 = arith.subf %176, %177 : vector<1x2xf32>
    %179 = math.exp %178 : vector<1x2xf32>
    %180 = arith.mulf %165, %179 : vector<1x2xf32>
    %c1_i32_50 = arith.constant 1 : i32
    %181 = arith.addi %c11_i32, %c1_i32_50 : i32
    %182 = arith.index_cast %181 : i32 to index
    %c0_51 = arith.constant 0 : index
    %183 = vector.load %arg2[%182, %c0_51] : memref<16x2xf32, #tpu.memory_space<vmem>>, vector<1x2xf32>
    tpu.vector_store %arg2[%182, %c0_51], %180 {strides = array<i32>} : memref<16x2xf32, #tpu.memory_space<vmem>>, vector<1x2xf32>,
    %c12_i32 = arith.constant 12 : i32
    %cst_52 = arith.constant dense<0.000000e+00> : vector<1xf32>
    %184 = vector.multi_reduction <add>, %180, %cst_52 [1] : vector<1x2xf32> to vector<1xf32>
    %185 = vector.shape_cast %184 : vector<1xf32> to vector<1x1xf32>
    %186 = vector.broadcast %185 : vector<1x1xf32> to vector<1x2xf32>
    %187 = arith.subf %186, %180 : vector<1x2xf32>
    %188 = arith.index_cast %c12_i32 : i32 to index
    %c0_53 = arith.constant 0 : index
    %189 = vector.load %arg1[%188, %c0_53] : memref<16x2xf32, #tpu.memory_space<vmem>>, vector<1x2xf32>
    %190 = arith.mulf %0, %180 : vector<1x2xf32>
    %191 = arith.subf %189, %190 : vector<1x2xf32>
    %192 = arith.mulf %1, %187 : vector<1x2xf32>
    %193 = arith.subf %191, %192 : vector<1x2xf32>
    %194 = math.exp %193 : vector<1x2xf32>
    %195 = arith.mulf %180, %194 : vector<1x2xf32>
    %c1_i32_54 = arith.constant 1 : i32
    %196 = arith.addi %c12_i32, %c1_i32_54 : i32
    %197 = arith.index_cast %196 : i32 to index
    %c0_55 = arith.constant 0 : index
    %198 = vector.load %arg2[%197, %c0_55] : memref<16x2xf32, #tpu.memory_space<vmem>>, vector<1x2xf32>
    tpu.vector_store %arg2[%197, %c0_55], %195 {strides = array<i32>} : memref<16x2xf32, #tpu.memory_space<vmem>>, vector<1x2xf32>,
    %c13_i32 = arith.constant 13 : i32
    %cst_56 = arith.constant dense<0.000000e+00> : vector<1xf32>
    %199 = vector.multi_reduction <add>, %195, %cst_56 [1] : vector<1x2xf32> to vector<1xf32>
    %200 = vector.shape_cast %199 : vector<1xf32> to vector<1x1xf32>
    %201 = vector.broadcast %200 : vector<1x1xf32> to vector<1x2xf32>
    %202 = arith.subf %201, %195 : vector<1x2xf32>
    %203 = arith.index_cast %c13_i32 : i32 to index
    %c0_57 = arith.constant 0 : index
    %204 = vector.load %arg1[%203, %c0_57] : memref<16x2xf32, #tpu.memory_space<vmem>>, vector<1x2xf32>
    %205 = arith.mulf %0, %195 : vector<1x2xf32>
    %206 = arith.subf %204, %205 : vector<1x2xf32>
    %207 = arith.mulf %1, %202 : vector<1x2xf32>
    %208 = arith.subf %206, %207 : vector<1x2xf32>
    %209 = math.exp %208 : vector<1x2xf32>
    %210 = arith.mulf %195, %209 : vector<1x2xf32>
    %c1_i32_58 = arith.constant 1 : i32
    %211 = arith.addi %c13_i32, %c1_i32_58 : i32
    %212 = arith.index_cast %211 : i32 to index
    %c0_59 = arith.constant 0 : index
    %213 = vector.load %arg2[%212, %c0_59] : memref<16x2xf32, #tpu.memory_space<vmem>>, vector<1x2xf32>
    tpu.vector_store %arg2[%212, %c0_59], %210 {strides = array<i32>} : memref<16x2xf32, #tpu.memory_space<vmem>>, vector<1x2xf32>,
    %c14_i32 = arith.constant 14 : i32
    %cst_60 = arith.constant dense<0.000000e+00> : vector<1xf32>
    %214 = vector.multi_reduction <add>, %210, %cst_60 [1] : vector<1x2xf32> to vector<1xf32>
    %215 = vector.shape_cast %214 : vector<1xf32> to vector<1x1xf32>
    %216 = vector.broadcast %215 : vector<1x1xf32> to vector<1x2xf32>
    %217 = arith.subf %216, %210 : vector<1x2xf32>
    %218 = arith.index_cast %c14_i32 : i32 to index
    %c0_61 = arith.constant 0 : index
    %219 = vector.load %arg1[%218, %c0_61] : memref<16x2xf32, #tpu.memory_space<vmem>>, vector<1x2xf32>
    %220 = arith.mulf %0, %210 : vector<1x2xf32>
    %221 = arith.subf %219, %220 : vector<1x2xf32>
    %222 = arith.mulf %1, %217 : vector<1x2xf32>
    %223 = arith.subf %221, %222 : vector<1x2xf32>
    %224 = math.exp %223 : vector<1x2xf32>
    %225 = arith.mulf %210, %224 : vector<1x2xf32>
    %c1_i32_62 = arith.constant 1 : i32
    %226 = arith.addi %c14_i32, %c1_i32_62 : i32
    %227 = arith.index_cast %226 : i32 to index
    %c0_63 = arith.constant 0 : index
    %228 = vector.load %arg2[%227, %c0_63] : memref<16x2xf32, #tpu.memory_space<vmem>>, vector<1x2xf32>
    tpu.vector_store %arg2[%227, %c0_63], %225 {strides = array<i32>} : memref<16x2xf32, #tpu.memory_space<vmem>>, vector<1x2xf32>,
    %c15_i32 = arith.constant 15 : i32
    return
  }
}

</mosaic_0001>

<llo_original>
// kernel: tpu_custom_call.1
$region0: #{tpu_custom_call.1}
  #allocation0 [shape = 'u32[]', space=smem, size = 0x4, offset = 0x4, fixed_abs, tag = 'smem constant byte address 0x4 - core index']
  #allocation1 [shape = 'u32[144,128]{1,0:T(1,128)}', space=vmem, size = 0x12000, scoped, tag = 'internal scratch']
  %s0 = inlined_call_operand.vmem [shape: f32[2,2], index: 0, kind: input, shape index: {}]
  %s1 = inlined_call_operand.vmem [shape: f32[16,2], index: 1, kind: input, shape index: {}]
  %s2 = inlined_call_operand.vmem [shape: f32[16,2], index: 2, kind: output, shape index: {}]
  %s3 = sld [smem:[#allocation0]]
  $region18: #{tpu_custom_call.1} parent=0
    _
  %s5 = ssub.s32 1, %s3
  %s6 = scalar_select 0, %s5, %s3
  // Predicated region
  $region2: #{tpu_custom_call.1} parent=0 // pred_check
    _
  $region3: #{tpu_custom_call.1} parent=0 // pred_check_branch
    %8 = sbr.rel (0) target = $region5
  $region4: #{tpu_custom_call.1} parent=0 // pred_region
    _
  $region5: #{tpu_custom_call.1} parent=0 // pred_fallthru
    _
  // Predicated region
  $region6: #{tpu_custom_call.1} parent=0 // pred_check
    _
  $region7: #{tpu_custom_call.1} parent=0 // pred_check_branch
    %10 = sbr.rel (0) target = $region9
  $region8: #{tpu_custom_call.1} parent=0 // pred_region
    _
  $region9: #{tpu_custom_call.1} parent=0 // pred_fallthru
    _
  %v11 = vld [vmem:[%s0] sm:$0x1]
  %v12 = vld [vmem:[%s0 + $0x1] sm:$0x1]
  %vm13 = vcmask 8192
  %14 = vst.msk [vmem:[%s2] sm:$0x1] %vm13, 1.0
  %vm15 = vcmask 15360
  %v16 = vsel %vm15, 1.0, 0.0
  %17 = vadd.xlane.f32.xlu0 %v16
  %v18 = vpop.xlane.xlu0 %17
  %v19 = vsub.f32 %v18, 1.0
  %v20 = vld [vmem:[%s1] sm:$0x1]
  %v21 = vsub.f32 %v20, %v11
  %v22 = vmul.f32 %v12, %v19
  %v23 = vsub.f32 %v21, %v22
  %v24 = vmul.f32 %v23, 1.442695
  %v25 = vpow.pop %v24
  %26 = vst.msk [vmem:[%s2 + $0x1] sm:$0x1] %vm13, %v25
  %v27 = vsel %vm13, %v25, 0.0
  %28 = vadd.xlane.f32.xlu0 %v27
  %v29 = vpop.xlane.xlu0 %28
  %v30 = vsub.f32 %v29, %v25
  %v31 = vld [vmem:[%s1 + $0x1] sm:$0x1]
  %v32 = vmul.f32 %v11, %v25
  %v33 = vsub.f32 %v31, %v32
  %v34 = vmul.f32 %v12, %v30
  %v35 = vsub.f32 %v33, %v34
  %v36 = vmul.f32 %v35, 1.442695
  %v37 = vpow.pop %v36
  %v38 = vmul.f32 %v25, %v37
  %39 = vst.msk [vmem:[%s2 + $0x2] sm:$0x1] %vm13, %v38
  %v40 = vsel %vm13, %v38, 0.0
  %41 = vadd.xlane.f32.xlu0 %v40
  %v42 = vpop.xlane.xlu0 %41
  %v43 = vsub.f32 %v42, %v38
  %v44 = vld [vmem:[%s1 + $0x2] sm:$0x1]
  %v45 = vmul.f32 %v11, %v38
  %v46 = vsub.f32 %v44, %v45
  %v47 = vmul.f32 %v12, %v43
  %v48 = vsub.f32 %v46, %v47
  %v49 = vmul.f32 %v48, 1.442695
  %v50 = vpow.pop %v49
  %v51 = vmul.f32 %v38, %v50
  %52 = vst.msk [vmem:[%s2 + $0x3] sm:$0x1] %vm13, %v51
  %v53 = vsel %vm13, %v51, 0.0
  %54 = vadd.xlane.f32.xlu0 %v53
  %v55 = vpop.xlane.xlu0 %54
  %v56 = vsub.f32 %v55, %v51
  %v57 = vld [vmem:[%s1 + $0x3] sm:$0x1]
  %v58 = vmul.f32 %v11, %v51
  %v59 = vsub.f32 %v57, %v58
  %v60 = vmul.f32 %v12, %v56
  %v61 = vsub.f32 %v59, %v60
  %v62 = vmul.f32 %v61, 1.442695
  %v63 = vpow.pop %v62
  %v64 = vmul.f32 %v51, %v63
  %65 = vst.msk [vmem:[%s2 + $0x4] sm:$0x1] %vm13, %v64
  %v66 = vsel %vm13, %v64, 0.0
  %67 = vadd.xlane.f32.xlu0 %v66
  %v68 = vpop.xlane.xlu0 %67
  %v69 = vsub.f32 %v68, %v64
  %v70 = vld [vmem:[%s1 + $0x4] sm:$0x1]
  %v71 = vmul.f32 %v11, %v64
  %v72 = vsub.f32 %v70, %v71
  %v73 = vmul.f32 %v12, %v69
  %v74 = vsub.f32 %v72, %v73
  %v75 = vmul.f32 %v74, 1.442695
  %v76 = vpow.pop %v75
  %v77 = vmul.f32 %v64, %v76
  %78 = vst.msk [vmem:[%s2 + $0x5] sm:$0x1] %vm13, %v77
  %v79 = vsel %vm13, %v77, 0.0
  %80 = vadd.xlane.f32.xlu0 %v79
  %v81 = vpop.xlane.xlu0 %80
  %v82 = vsub.f32 %v81, %v77
  %v83 = vld [vmem:[%s1 + $0x5] sm:$0x1]
  %v84 = vmul.f32 %v11, %v77
  %v85 = vsub.f32 %v83, %v84
  %v86 = vmul.f32 %v12, %v82
  %v87 = vsub.f32 %v85, %v86
  %v88 = vmul.f32 %v87, 1.442695
  %v89 = vpow.pop %v88
  %v90 = vmul.f32 %v77, %v89
  %91 = vst.msk [vmem:[%s2 + $0x6] sm:$0x1] %vm13, %v90
  %v92 = vsel %vm13, %v90, 0.0
  %93 = vadd.xlane.f32.xlu0 %v92
  %v94 = vpop.xlane.xlu0 %93
  %v95 = vsub.f32 %v94, %v90
  %v96 = vld [vmem:[%s1 + $0x6] sm:$0x1]
  %v97 = vmul.f32 %v11, %v90
  %v98 = vsub.f32 %v96, %v97
  %v99 = vmul.f32 %v12, %v95
  %v100 = vsub.f32 %v98, %v99
  %v101 = vmul.f32 %v100, 1.442695
  %v102 = vpow.pop %v101
  %v103 = vmul.f32 %v90, %v102
  %104 = vst.msk [vmem:[%s2 + $0x7] sm:$0x1] %vm13, %v103
  %v105 = vsel %vm13, %v103, 0.0
  %106 = vadd.xlane.f32.xlu0 %v105
  %v107 = vpop.xlane.xlu0 %106
  %v108 = vsub.f32 %v107, %v103
  %v109 = vld [vmem:[%s1 + $0x7] sm:$0x1]
  %v110 = vmul.f32 %v11, %v103
  %v111 = vsub.f32 %v109, %v110
  %v112 = vmul.f32 %v12, %v108
  %v113 = vsub.f32 %v111, %v112
  %v114 = vmul.f32 %v113, 1.442695
  %v115 = vpow.pop %v114
  %v116 = vmul.f32 %v103, %v115
  %117 = vst.msk [vmem:[%s2 + $0x8] sm:$0x1] %vm13, %v116
  %v118 = vsel %vm13, %v116, 0.0
  %119 = vadd.xlane.f32.xlu0 %v118
  %v120 = vpop.xlane.xlu0 %119
  %v121 = vsub.f32 %v120, %v116
  %v122 = vld [vmem:[%s1 + $0x8] sm:$0x1]
  %v123 = vmul.f32 %v11, %v116
  %v124 = vsub.f32 %v122, %v123
  %v125 = vmul.f32 %v12, %v121
  %v126 = vsub.f32 %v124, %v125
  %v127 = vmul.f32 %v126, 1.442695
  %v128 = vpow.pop %v127
  %v129 = vmul.f32 %v116, %v128
  %130 = vst.msk [vmem:[%s2 + $0x9] sm:$0x1] %vm13, %v129
  %v131 = vsel %vm13, %v129, 0.0
  %132 = vadd.xlane.f32.xlu0 %v131
  %v133 = vpop.xlane.xlu0 %132
  %v134 = vsub.f32 %v133, %v129
  %v135 = vld [vmem:[%s1 + $0x9] sm:$0x1]
  %v136 = vmul.f32 %v11, %v129
  %v137 = vsub.f32 %v135, %v136
  %v138 = vmul.f32 %v12, %v134
  %v139 = vsub.f32 %v137, %v138
  %v140 = vmul.f32 %v139, 1.442695
  %v141 = vpow.pop %v140
  %v142 = vmul.f32 %v129, %v141
  %143 = vst.msk [vmem:[%s2 + $0xa] sm:$0x1] %vm13, %v142
  %v144 = vsel %vm13, %v142, 0.0
  %145 = vadd.xlane.f32.xlu0 %v144
  %v146 = vpop.xlane.xlu0 %145
  %v147 = vsub.f32 %v146, %v142
  %v148 = vld [vmem:[%s1 + $0xa] sm:$0x1]
  %v149 = vmul.f32 %v11, %v142
  %v150 = vsub.f32 %v148, %v149
  %v151 = vmul.f32 %v12, %v147
  %v152 = vsub.f32 %v150, %v151
  %v153 = vmul.f32 %v152, 1.442695
  %v154 = vpow.pop %v153
  %v155 = vmul.f32 %v142, %v154
  %156 = vst.msk [vmem:[%s2 + $0xb] sm:$0x1] %vm13, %v155
  %v157 = vsel %vm13, %v155, 0.0
  %158 = vadd.xlane.f32.xlu0 %v157
  %v159 = vpop.xlane.xlu0 %158
  %v160 = vsub.f32 %v159, %v155
  %v161 = vld [vmem:[%s1 + $0xb] sm:$0x1]
  %v162 = vmul.f32 %v11, %v155
  %v163 = vsub.f32 %v161, %v162
  %v164 = vmul.f32 %v12, %v160
  %v165 = vsub.f32 %v163, %v164
  %v166 = vmul.f32 %v165, 1.442695
  %v167 = vpow.pop %v166
  %v168 = vmul.f32 %v155, %v167
  %169 = vst.msk [vmem:[%s2 + $0xc] sm:$0x1] %vm13, %v168
  %v170 = vsel %vm13, %v168, 0.0
  %171 = vadd.xlane.f32.xlu0 %v170
  %v172 = vpop.xlane.xlu0 %171
  %v173 = vsub.f32 %v172, %v168
  %v174 = vld [vmem:[%s1 + $0xc] sm:$0x1]
  %v175 = vmul.f32 %v11, %v168
  %v176 = vsub.f32 %v174, %v175
  %v177 = vmul.f32 %v12, %v173
  %v178 = vsub.f32 %v176, %v177
  %v179 = vmul.f32 %v178, 1.442695
  %v180 = vpow.pop %v179
  %v181 = vmul.f32 %v168, %v180
  %182 = vst.msk [vmem:[%s2 + $0xd] sm:$0x1] %vm13, %v181
  %v183 = vsel %vm13, %v181, 0.0
  %184 = vadd.xlane.f32.xlu0 %v183
  %v185 = vpop.xlane.xlu0 %184
  %v186 = vsub.f32 %v185, %v181
  %v187 = vld [vmem:[%s1 + $0xd] sm:$0x1]
  %v188 = vmul.f32 %v11, %v181
  %v189 = vsub.f32 %v187, %v188
  %v190 = vmul.f32 %v12, %v186
  %v191 = vsub.f32 %v189, %v190
  %v192 = vmul.f32 %v191, 1.442695
  %v193 = vpow.pop %v192
  %v194 = vmul.f32 %v181, %v193
  %195 = vst.msk [vmem:[%s2 + $0xe] sm:$0x1] %vm13, %v194
  %v196 = vsel %vm13, %v194, 0.0
  %197 = vadd.xlane.f32.xlu0 %v196
  %v198 = vpop.xlane.xlu0 %197
  %v199 = vsub.f32 %v198, %v194
  %v200 = vld [vmem:[%s1 + $0xe] sm:$0x1]
  %v201 = vmul.f32 %v11, %v194
  %v202 = vsub.f32 %v200, %v201
  %v203 = vmul.f32 %v12, %v199
  %v204 = vsub.f32 %v202, %v203
  %v205 = vmul.f32 %v204, 1.442695
  %v206 = vpow.pop %v205
  %v207 = vmul.f32 %v194, %v206
  %208 = vst.msk [vmem:[%s2 + $0xf] sm:$0x1] %vm13, %v207
  // Predicated region
  $region10: #{tpu_custom_call.1} parent=0 // pred_check
    _
  $region11: #{tpu_custom_call.1} parent=0 // pred_check_branch
    %210 = sbr.rel (0) target = $region13
  $region12: #{tpu_custom_call.1} parent=0 // pred_region
    _
  $region13: #{tpu_custom_call.1} parent=0 // pred_fallthru
    _
  // Predicated region
  $region14: #{tpu_custom_call.1} parent=0 // pred_check
    _
  $region15: #{tpu_custom_call.1} parent=0 // pred_check_branch
    %212 = sbr.rel (0) target = $region17
  $region16: #{tpu_custom_call.1} parent=0 // pred_region
    _
  $region17: #{tpu_custom_call.1} parent=0 // pred_fallthru
    _

</llo_original>
